<compile_context>
chip_gen: v5e
topology: v5e:2x2
jax: 0.10.0
libtpu: 0.0.40
codegen_flags: <defaults>
</compile_context>

<pallas_src>
import math
from functools import partial

import jax
import jax.numpy as jnp
from jax.experimental import pallas as pl
from jax.experimental.pallas import tpu as pltpu


_NEG_INF = -1e30  # large-negative mask value (keeps exp() finite, no inf-inf NaNs)


def _vmem_limit_bytes():
    """Scoped-VMEM limit derived from the chip, with 25% headroom."""
    try:
        phys = int(pltpu.get_tpu_info().vmem_capacity_bytes)
    except Exception:
        phys = 64 * 1024 * 1024          # conservative (v7x-sized) fallback
    return (phys * 3) // 4


# --------------------------------------------------------------------------
# Kernel 1: fused QKV projection, head-major outputs.
#   x_ref              : (block_r, C)          bf16
#   wq/wk/wv_ref       : (C, C)                bf16  (Wq already scaled)
#   bq/bk/bv_ref       : (1, C)                f32
#   q/k/v_ref          : (n_head, block_r, hd) bf16
# --------------------------------------------------------------------------
def _qkv_proj_kernel(x_ref, wq_ref, wk_ref, wv_ref, bq_ref, bk_ref, bv_ref,
                     q_ref, k_ref, v_ref, *, n_head, head_dim):
    x = x_ref[...]                                             # (TR, C) bf16
    for w_ref, b_ref, o_ref in ((wq_ref, bq_ref, q_ref),
                                (wk_ref, bk_ref, k_ref),
                                (wv_ref, bv_ref, v_ref)):
        y = (jnp.dot(x, w_ref[...], preferred_element_type=jnp.float32)
             + b_ref[...]).astype(o_ref.dtype)                 # (TR, C)
        # Head-major store: one (TR, hd) slice per head (finalizes the layout
        # here once instead of an extra XLA transpose pass over HBM).
        for h in range(n_head):
            o_ref[h] = y[:, h * head_dim:(h + 1) * head_dim]


# --------------------------------------------------------------------------
# Kernel 2: flash attention (online softmax over KV blocks) + output proj.
#   q_ref/k_ref/v_ref : (H, block_q/k, hd) bf16   (q pre-scaled by 1/sqrt(hd))
#   wp_ref            : (H, hd, C)         bf16   (c_proj weight, head-major)
#   bp_ref            : (1, C)             f32
#   o_ref             : (block_q, C)       out dtype
# --------------------------------------------------------------------------
def _flash_attn_proj_kernel(q_ref, k_ref, v_ref, wp_ref, bp_ref, o_ref,
                            m_sc, l_sc, acc_sc, *, block_q, block_k):
    qi = pl.program_id(1)
    ki = pl.program_id(2)

    @pl.when(ki == 0)
    def _init():
        m_sc[...] = jnp.full(m_sc.shape, _NEG_INF, dtype=m_sc.dtype)
        l_sc[...] = jnp.zeros(l_sc.shape, dtype=l_sc.dtype)
        acc_sc[...] = jnp.zeros(acc_sc.shape, dtype=acc_sc.dtype)

    row0 = qi * block_q                       # first query row of this tile
    col0 = ki * block_k                       # first key column of this tile
    fully_visible = row0 >= col0 + (block_k - 1)              # no mask needed
    any_visible = row0 + (block_q - 1) >= col0                # touches diagonal
    straddles = any_visible & (row0 < col0 + (block_k - 1))   # needs masking

    def _scores():
        # Batched (over heads) score matmul, f32 accumulation.  sm_scale is
        # already folded into q (via Wq/bq), so no per-step VPU multiply.
        return jnp.einsum('hqd,hkd->hqk', q_ref[...], k_ref[...],
                          preferred_element_type=jnp.float32)

    def _online_update(s):
        v = v_ref[...]                                         # (H, TK, hd)
        m_prev = m_sc[...]                                     # (H, TQ, 1)
        m_new = jnp.maximum(m_prev, jnp.max(s, axis=-1, keepdims=True))
        alpha = jnp.exp(m_prev - m_new)
        p = jnp.exp(s - m_new)                                 # (H, TQ, TK) f32
        l_sc[...] = alpha * l_sc[...] + jnp.sum(p, axis=-1, keepdims=True)
        acc_sc[...] = alpha * acc_sc[...] + jnp.einsum(
            'hqk,hkd->hqd', p.astype(v.dtype), v,
            preferred_element_type=jnp.float32)
        m_sc[...] = m_new

    # Fast path: block is entirely below the causal diagonal -> no mask work.
    @pl.when(fully_visible)
    def _compute_unmasked():
        _online_update(_scores())

    # Diagonal-straddling block: build the tile-local mask and apply it.
    @pl.when(straddles)
    def _compute_masked():
        s = _scores()
        row = row0 + jax.lax.broadcasted_iota(jnp.int32, (block_q, block_k), 0)
        col = col0 + jax.lax.broadcasted_iota(jnp.int32, (block_q, block_k), 1)
        s = jnp.where((row >= col)[None, :, :], s, _NEG_INF)
        _online_update(s)

    @pl.when(ki == pl.num_programs(2) - 1)
    def _finalize():
        n_head = wp_ref.shape[0]
        # Normalize with an EUP reciprocal (frees the VALU slot).
        o_h = (acc_sc[...] * pl.reciprocal(l_sc[...], approx=True)
               ).astype(jnp.bfloat16)                          # (H, TQ, hd)
        # Fold the per-head output projection directly into a (TQ, C)
        # accumulator (head reduction happens inside the MXU accumulation;
        # no (H, TQ, C) f32 intermediate, no cross-sublane head sum).
        y = jnp.zeros(o_ref.shape, jnp.float32)                # (TQ, C)
        for h in range(n_head):
            y = y + jnp.dot(o_h[h], wp_ref[h],
                            preferred_element_type=jnp.float32)
        o_ref[...] = (y + bp_ref[...]).astype(o_ref.dtype)


# --------------------------------------------------------------------------
# Wrapper
# --------------------------------------------------------------------------
def causal_self_attention(x, wqkv, bqkv, wproj, bproj, *, n_head,
                          block_q=None, block_k=None, block_r=None):
    B, T, C = x.shape
    assert C % n_head == 0
    hd = C // n_head
    # 256-wide tiles fill the 2x256x256 MXU on v6e/v7x; still fine on v5e.
    block_q = block_q or min(T, 256)
    block_k = block_k or min(T, 256)
    block_r = block_r or min(T, 512)
    assert T % block_q == 0 and T % block_k == 0 and T % block_r == 0

    sm_scale = 1.0 / math.sqrt(hd)

    # Weight prep (one-time, outside the kernels):
    #  - split Wqkv into Wq/Wk/Wv and fold the softmax scale into Wq/bq,
    #  - bf16 operands for the MXU (f32 accumulation requested in-kernel),
    #  - head-major view of the c_proj weight.
    wq = (wqkv[:, :C] * sm_scale).astype(jnp.bfloat16)
    wk = wqkv[:, C:2 * C].astype(jnp.bfloat16)
    wv = wqkv[:, 2 * C:].astype(jnp.bfloat16)
    bq = (bqkv[:, :C] * sm_scale).astype(jnp.float32)
    bk = bqkv[:, C:2 * C].astype(jnp.float32)
    bv = bqkv[:, 2 * C:].astype(jnp.float32)
    wproj_heads = wproj.reshape(n_head, hd, C).astype(jnp.bfloat16)
    bproj_f32 = bproj.astype(jnp.float32)
    x_bf = x.astype(jnp.bfloat16)          # halve the x DMA stream

    vmem_cap = _vmem_limit_bytes()

    # ---- Kernel 1: QKV projection, head-major outputs ----------------------
    head_major_spec = pl.BlockSpec((pl.Squeezed(), n_head, block_r, hd),
                                   lambda b, t: (b, 0, t, 0))
    qkv_out = jax.ShapeDtypeStruct((B, n_head, T, hd), jnp.bfloat16)

    q, k, v = pl.pallas_call(
        partial(_qkv_proj_kernel, n_head=n_head, head_dim=hd),
        out_shape=(qkv_out, qkv_out, qkv_out),
        grid_spec=pltpu.PrefetchScalarGridSpec(
            num_scalar_prefetch=0,
            grid=(B, T // block_r),
            in_specs=[
                pl.BlockSpec((pl.Squeezed(), block_r, C), lambda b, t: (b, t, 0)),
                pl.BlockSpec((C, C), lambda b, t: (0, 0)),
                pl.BlockSpec((C, C), lambda b, t: (0, 0)),
                pl.BlockSpec((C, C), lambda b, t: (0, 0)),
                pl.BlockSpec((1, C), lambda b, t: (0, 0)),
                pl.BlockSpec((1, C), lambda b, t: (0, 0)),
                pl.BlockSpec((1, C), lambda b, t: (0, 0)),
            ],
            out_specs=(head_major_spec, head_major_spec, head_major_spec),
        ),
        compiler_params=pltpu.CompilerParams(
            dimension_semantics=("parallel", "parallel"),
            vmem_limit_bytes=vmem_cap),
    )(x_bf, wq, wk, wv, bq, bk, bv)

    # ---- Kernel 2: flash attention + output projection ---------------------
    def _q_index_map(b, qi, ki):
        return (b, 0, qi, 0)

    def _kv_index_map(b, qi, ki):
        # Clamp masked-out KV steps to the last causally-visible block: the
        # block is already resident, so Pallas elides the DMA re-fetch
        # (pl.when alone only skips compute, not the BlockSpec DMA).
        kmax = (qi * block_q + (block_q - 1)) // block_k
        return (b, 0, jnp.minimum(ki, kmax), 0)

    kv_spec = pl.BlockSpec((pl.Squeezed(), n_head, block_k, hd), _kv_index_map)

    out = pl.pallas_call(
        partial(_flash_attn_proj_kernel, block_q=block_q, block_k=block_k),
        out_shape=jax.ShapeDtypeStruct((B, T, C), x.dtype),
        grid_spec=pltpu.PrefetchScalarGridSpec(
            num_scalar_prefetch=0,
            grid=(B, T // block_q, T // block_k),
            in_specs=[
                pl.BlockSpec((pl.Squeezed(), n_head, block_q, hd), _q_index_map),
                kv_spec,
                kv_spec,
                pl.BlockSpec((n_head, hd, C), lambda b, qi, ki: (0, 0, 0)),
                pl.BlockSpec((1, C), lambda b, qi, ki: (0, 0)),
            ],
            out_specs=pl.BlockSpec((pl.Squeezed(), block_q, C),
                                   lambda b, qi, ki: (b, qi, 0)),
            scratch_shapes=[
                pltpu.VMEM((n_head, block_q, 1), jnp.float32),    # running max
                pltpu.VMEM((n_head, block_q, 1), jnp.float32),    # running sum
                pltpu.VMEM((n_head, block_q, hd), jnp.float32),   # output acc
            ],
        ),
        compiler_params=pltpu.CompilerParams(
            dimension_semantics=("parallel", "parallel", "arbitrary"),
            vmem_limit_bytes=vmem_cap),
    )(q, k, v, wproj_heads, bproj_f32)

    return out


# --------------------------------------------------------------------------
# Pure-JAX reference (f32) for correctness checking
# --------------------------------------------------------------------------
def reference_attention(x, wqkv, bqkv, wproj, bproj, n_head):
    B, T, C = x.shape
    hd = C // n_head
    qkv = x @ wqkv + bqkv
    q, k, v = jnp.split(qkv, 3, axis=-1)
    q = q.reshape(B, T, n_head, hd).transpose(0, 2, 1, 3)
    k = k.reshape(B, T, n_head, hd).transpose(0, 2, 1, 3)
    v = v.reshape(B, T, n_head, hd).transpose(0, 2, 1, 3)
    s = jnp.einsum('bhqd,bhkd->bhqk', q, k) / math.sqrt(hd)
    mask = jnp.tril(jnp.ones((T, T), dtype=bool))
    s = jnp.where(mask, s, -jnp.inf)
    p = jax.nn.softmax(s, axis=-1)
    y = jnp.einsum('bhqk,bhkd->bhqd', p, v)
    y = y.transpose(0, 2, 1, 3).reshape(B, T, C)
    return y @ wproj + bproj


if __name__ == "__main__":
    B, T, C, n_head = 2, 8, 32, 4

    key = jax.random.PRNGKey(0)
    k0, k1, k2, k3, k4 = jax.random.split(key, 5)
    scale = 0.1

    wqkv = scale * jax.random.normal(k0, (C, 3 * C), jnp.float32)   # c_attn W
    bqkv = scale * jax.random.normal(k1, (1, 3 * C), jnp.float32)   # c_attn b
    wproj = scale * jax.random.normal(k2, (C, C), jnp.float32)      # c_proj W
    bproj = scale * jax.random.normal(k3, (1, C), jnp.float32)      # c_proj b
    x = jax.random.normal(k4, (B, T, C), jnp.float32)

    out = causal_self_attention(x, wqkv, bqkv, wproj, bproj, n_head=n_head)
    out = jax.block_until_ready(out)

    ref = reference_attention(x, wqkv, bqkv, wproj, bproj, n_head)
    assert out.shape == (B, T, C)
    assert jnp.allclose(out, ref, atol=2e-2, rtol=2e-2), (
        f"mismatch vs reference, max abs err = {jnp.max(jnp.abs(out - ref))}")

    print("KERNEL_OK")
</pallas_src>

<mosaic_0001>
module attributes {stable_mosaic.version = 11 : i64} {
  func.func @_qkv_proj_kernel(%arg0: i32, %arg1: i32, %arg2: memref<1x8x32xbf16, #tpu.memory_space<vmem>>, %arg3: memref<32x32xbf16, #tpu.memory_space<vmem>>, %arg4: memref<32x32xbf16, #tpu.memory_space<vmem>>, %arg5: memref<32x32xbf16, #tpu.memory_space<vmem>>, %arg6: memref<1x32xf32, #tpu.memory_space<vmem>>, %arg7: memref<1x32xf32, #tpu.memory_space<vmem>>, %arg8: memref<1x32xf32, #tpu.memory_space<vmem>>, %arg9: memref<1x4x8x8xbf16, #tpu.memory_space<vmem>>, %arg10: memref<1x4x8x8xbf16, #tpu.memory_space<vmem>>, %arg11: memref<1x4x8x8xbf16, #tpu.memory_space<vmem>>) attributes {dimension_semantics = [#tpu.dimension_semantics<parallel>, #tpu.dimension_semantics<parallel>], iteration_bounds = array<i64: 2, 1>, scalar_prefetch = 0 : i64, scratch_operands = 0 : i64, tpu.core_type = #tpu.core_type<tc>, window_params = [{transform_indices = @transform_0, window_bounds = array<i64: 1, 8, 32>}, {pipeline_mode = #tpu.pipeline_mode<synchronous>, transform_indices = @transform_1, window_bounds = array<i64: 32, 32>}, {pipeline_mode = #tpu.pipeline_mode<synchronous>, transform_indices = @transform_2, window_bounds = array<i64: 32, 32>}, {pipeline_mode = #tpu.pipeline_mode<synchronous>, transform_indices = @transform_3, window_bounds = array<i64: 32, 32>}, {pipeline_mode = #tpu.pipeline_mode<synchronous>, transform_indices = @transform_4, window_bounds = array<i64: 1, 32>}, {pipeline_mode = #tpu.pipeline_mode<synchronous>, transform_indices = @transform_5, window_bounds = array<i64: 1, 32>}, {pipeline_mode = #tpu.pipeline_mode<synchronous>, transform_indices = @transform_6, window_bounds = array<i64: 1, 32>}, {transform_indices = @transform_7, window_bounds = array<i64: 1, 4, 8, 8>}, {transform_indices = @transform_8, window_bounds = array<i64: 1, 4, 8, 8>}, {transform_indices = @transform_9, window_bounds = array<i64: 1, 4, 8, 8>}]} {
    %c0 = arith.constant 0 : index
    %c0_0 = arith.constant 0 : index
    %c0_1 = arith.constant 0 : index
    %0 = vector.load %arg2[%c0, %c0_0, %c0_1] : memref<1x8x32xbf16, #tpu.memory_space<vmem>>, vector<1x8x32xbf16>
    %1 = vector.shape_cast %0 : vector<1x8x32xbf16> to vector<8x32xbf16>
    %c0_2 = arith.constant 0 : index
    %c0_3 = arith.constant 0 : index
    %2 = vector.load %arg3[%c0_2, %c0_3] : memref<32x32xbf16, #tpu.memory_space<vmem>>, vector<32x32xbf16>
    %cst = arith.constant dense<0.000000e+00> : vector<8x32xf32>
    %3 = tpu.matmul %1, %2, %cst {dimension_numbers = #tpu.dot_dimension_numbers<[1], [0], [0], [1], [0, 0, 1, 1], [], []>} : vector<8x32xbf16>, vector<32x32xbf16>, vector<8x32xf32> -> vector<8x32xf32>
    %c0_4 = arith.constant 0 : index
    %c0_5 = arith.constant 0 : index
    %4 = vector.load %arg6[%c0_4, %c0_5] : memref<1x32xf32, #tpu.memory_space<vmem>>, vector<1x32xf32>
    %5 = vector.broadcast %4 : vector<1x32xf32> to vector<8x32xf32>
    %6 = arith.addf %3, %5 : vector<8x32xf32>
    %7 = arith.truncf %6 : vector<8x32xf32> to vector<8x32xbf16>
    %8 = vector.extract_strided_slice %7 {offsets = [0, 0], sizes = [8, 8], strides = [1, 1]} : vector<8x32xbf16> to vector<8x8xbf16>
    %c0_6 = arith.constant 0 : index
    %c0_7 = arith.constant 0 : index
    %c0_8 = arith.constant 0 : index
    %c0_9 = arith.constant 0 : index
    %9 = vector.load %arg9[%c0_6, %c0_7, %c0_8, %c0_9] : memref<1x4x8x8xbf16, #tpu.memory_space<vmem>>, vector<1x1x8x8xbf16>
    %10 = vector.shape_cast %9 : vector<1x1x8x8xbf16> to vector<8x8xbf16>
    %11 = vector.shape_cast %8 : vector<8x8xbf16> to vector<1x1x8x8xbf16>
    tpu.vector_store %arg9[%c0_6, %c0_7, %c0_8, %c0_9], %11 {strides = array<i32>} : memref<1x4x8x8xbf16, #tpu.memory_space<vmem>>, vector<1x1x8x8xbf16>,
    %12 = vector.extract_strided_slice %7 {offsets = [0, 8], sizes = [8, 8], strides = [1, 1]} : vector<8x32xbf16> to vector<8x8xbf16>
    %c0_10 = arith.constant 0 : index
    %c1 = arith.constant 1 : index
    %c0_11 = arith.constant 0 : index
    %c0_12 = arith.constant 0 : index
    %13 = vector.load %arg9[%c0_10, %c1, %c0_11, %c0_12] : memref<1x4x8x8xbf16, #tpu.memory_space<vmem>>, vector<1x1x8x8xbf16>
    %14 = vector.shape_cast %13 : vector<1x1x8x8xbf16> to vector<8x8xbf16>
    %15 = vector.shape_cast %12 : vector<8x8xbf16> to vector<1x1x8x8xbf16>
    tpu.vector_store %arg9[%c0_10, %c1, %c0_11, %c0_12], %15 {strides = array<i32>} : memref<1x4x8x8xbf16, #tpu.memory_space<vmem>>, vector<1x1x8x8xbf16>,
    %16 = vector.extract_strided_slice %7 {offsets = [0, 16], sizes = [8, 8], strides = [1, 1]} : vector<8x32xbf16> to vector<8x8xbf16>
    %c0_13 = arith.constant 0 : index
    %c2 = arith.constant 2 : index
    %c0_14 = arith.constant 0 : index
    %c0_15 = arith.constant 0 : index
    %17 = vector.load %arg9[%c0_13, %c2, %c0_14, %c0_15] : memref<1x4x8x8xbf16, #tpu.memory_space<vmem>>, vector<1x1x8x8xbf16>
    %18 = vector.shape_cast %17 : vector<1x1x8x8xbf16> to vector<8x8xbf16>
    %19 = vector.shape_cast %16 : vector<8x8xbf16> to vector<1x1x8x8xbf16>
    tpu.vector_store %arg9[%c0_13, %c2, %c0_14, %c0_15], %19 {strides = array<i32>} : memref<1x4x8x8xbf16, #tpu.memory_space<vmem>>, vector<1x1x8x8xbf16>,
    %20 = vector.extract_strided_slice %7 {offsets = [0, 24], sizes = [8, 8], strides = [1, 1]} : vector<8x32xbf16> to vector<8x8xbf16>
    %c0_16 = arith.constant 0 : index
    %c3 = arith.constant 3 : index
    %c0_17 = arith.constant 0 : index
    %c0_18 = arith.constant 0 : index
    %21 = vector.load %arg9[%c0_16, %c3, %c0_17, %c0_18] : memref<1x4x8x8xbf16, #tpu.memory_space<vmem>>, vector<1x1x8x8xbf16>
    %22 = vector.shape_cast %21 : vector<1x1x8x8xbf16> to vector<8x8xbf16>
    %23 = vector.shape_cast %20 : vector<8x8xbf16> to vector<1x1x8x8xbf16>
    tpu.vector_store %arg9[%c0_16, %c3, %c0_17, %c0_18], %23 {strides = array<i32>} : memref<1x4x8x8xbf16, #tpu.memory_space<vmem>>, vector<1x1x8x8xbf16>,
    %c0_19 = arith.constant 0 : index
    %c0_20 = arith.constant 0 : index
    %24 = vector.load %arg4[%c0_19, %c0_20] : memref<32x32xbf16, #tpu.memory_space<vmem>>, vector<32x32xbf16>
    %cst_21 = arith.constant dense<0.000000e+00> : vector<8x32xf32>
    %25 = tpu.matmul %1, %24, %cst_21 {dimension_numbers = #tpu.dot_dimension_numbers<[1], [0], [0], [1], [0, 0, 1, 1], [], []>} : vector<8x32xbf16>, vector<32x32xbf16>, vector<8x32xf32> -> vector<8x32xf32>
    %c0_22 = arith.constant 0 : index
    %c0_23 = arith.constant 0 : index
    %26 = vector.load %arg7[%c0_22, %c0_23] : memref<1x32xf32, #tpu.memory_space<vmem>>, vector<1x32xf32>
    %27 = vector.broadcast %26 : vector<1x32xf32> to vector<8x32xf32>
    %28 = arith.addf %25, %27 : vector<8x32xf32>
    %29 = arith.truncf %28 : vector<8x32xf32> to vector<8x32xbf16>
    %30 = vector.extract_strided_slice %29 {offsets = [0, 0], sizes = [8, 8], strides = [1, 1]} : vector<8x32xbf16> to vector<8x8xbf16>
    %c0_24 = arith.constant 0 : index
    %c0_25 = arith.constant 0 : index
    %c0_26 = arith.constant 0 : index
    %c0_27 = arith.constant 0 : index
    %31 = vector.load %arg10[%c0_24, %c0_25, %c0_26, %c0_27] : memref<1x4x8x8xbf16, #tpu.memory_space<vmem>>, vector<1x1x8x8xbf16>
    %32 = vector.shape_cast %31 : vector<1x1x8x8xbf16> to vector<8x8xbf16>
    %33 = vector.shape_cast %30 : vector<8x8xbf16> to vector<1x1x8x8xbf16>
    tpu.vector_store %arg10[%c0_24, %c0_25, %c0_26, %c0_27], %33 {strides = array<i32>} : memref<1x4x8x8xbf16, #tpu.memory_space<vmem>>, vector<1x1x8x8xbf16>,
    %34 = vector.extract_strided_slice %29 {offsets = [0, 8], sizes = [8, 8], strides = [1, 1]} : vector<8x32xbf16> to vector<8x8xbf16>
    %c0_28 = arith.constant 0 : index
    %c1_29 = arith.constant 1 : index
    %c0_30 = arith.constant 0 : index
    %c0_31 = arith.constant 0 : index
    %35 = vector.load %arg10[%c0_28, %c1_29, %c0_30, %c0_31] : memref<1x4x8x8xbf16, #tpu.memory_space<vmem>>, vector<1x1x8x8xbf16>
    %36 = vector.shape_cast %35 : vector<1x1x8x8xbf16> to vector<8x8xbf16>
    %37 = vector.shape_cast %34 : vector<8x8xbf16> to vector<1x1x8x8xbf16>
    tpu.vector_store %arg10[%c0_28, %c1_29, %c0_30, %c0_31], %37 {strides = array<i32>} : memref<1x4x8x8xbf16, #tpu.memory_space<vmem>>, vector<1x1x8x8xbf16>,
    %38 = vector.extract_strided_slice %29 {offsets = [0, 16], sizes = [8, 8], strides = [1, 1]} : vector<8x32xbf16> to vector<8x8xbf16>
    %c0_32 = arith.constant 0 : index
    %c2_33 = arith.constant 2 : index
    %c0_34 = arith.constant 0 : index
    %c0_35 = arith.constant 0 : index
    %39 = vector.load %arg10[%c0_32, %c2_33, %c0_34, %c0_35] : memref<1x4x8x8xbf16, #tpu.memory_space<vmem>>, vector<1x1x8x8xbf16>
    %40 = vector.shape_cast %39 : vector<1x1x8x8xbf16> to vector<8x8xbf16>
    %41 = vector.shape_cast %38 : vector<8x8xbf16> to vector<1x1x8x8xbf16>
    tpu.vector_store %arg10[%c0_32, %c2_33, %c0_34, %c0_35], %41 {strides = array<i32>} : memref<1x4x8x8xbf16, #tpu.memory_space<vmem>>, vector<1x1x8x8xbf16>,
    %42 = vector.extract_strided_slice %29 {offsets = [0, 24], sizes = [8, 8], strides = [1, 1]} : vector<8x32xbf16> to vector<8x8xbf16>
    %c0_36 = arith.constant 0 : index
    %c3_37 = arith.constant 3 : index
    %c0_38 = arith.constant 0 : index
    %c0_39 = arith.constant 0 : index
    %43 = vector.load %arg10[%c0_36, %c3_37, %c0_38, %c0_39] : memref<1x4x8x8xbf16, #tpu.memory_space<vmem>>, vector<1x1x8x8xbf16>
    %44 = vector.shape_cast %43 : vector<1x1x8x8xbf16> to vector<8x8xbf16>
    %45 = vector.shape_cast %42 : vector<8x8xbf16> to vector<1x1x8x8xbf16>
    tpu.vector_store %arg10[%c0_36, %c3_37, %c0_38, %c0_39], %45 {strides = array<i32>} : memref<1x4x8x8xbf16, #tpu.memory_space<vmem>>, vector<1x1x8x8xbf16>,
    %c0_40 = arith.constant 0 : index
    %c0_41 = arith.constant 0 : index
    %46 = vector.load %arg5[%c0_40, %c0_41] : memref<32x32xbf16, #tpu.memory_space<vmem>>, vector<32x32xbf16>
    %cst_42 = arith.constant dense<0.000000e+00> : vector<8x32xf32>
    %47 = tpu.matmul %1, %46, %cst_42 {dimension_numbers = #tpu.dot_dimension_numbers<[1], [0], [0], [1], [0, 0, 1, 1], [], []>} : vector<8x32xbf16>, vector<32x32xbf16>, vector<8x32xf32> -> vector<8x32xf32>
    %c0_43 = arith.constant 0 : index
    %c0_44 = arith.constant 0 : index
    %48 = vector.load %arg8[%c0_43, %c0_44] : memref<1x32xf32, #tpu.memory_space<vmem>>, vector<1x32xf32>
    %49 = vector.broadcast %48 : vector<1x32xf32> to vector<8x32xf32>
    %50 = arith.addf %47, %49 : vector<8x32xf32>
    %51 = arith.truncf %50 : vector<8x32xf32> to vector<8x32xbf16>
    %52 = vector.extract_strided_slice %51 {offsets = [0, 0], sizes = [8, 8], strides = [1, 1]} : vector<8x32xbf16> to vector<8x8xbf16>
    %c0_45 = arith.constant 0 : index
    %c0_46 = arith.constant 0 : index
    %c0_47 = arith.constant 0 : index
    %c0_48 = arith.constant 0 : index
    %53 = vector.load %arg11[%c0_45, %c0_46, %c0_47, %c0_48] : memref<1x4x8x8xbf16, #tpu.memory_space<vmem>>, vector<1x1x8x8xbf16>
    %54 = vector.shape_cast %53 : vector<1x1x8x8xbf16> to vector<8x8xbf16>
    %55 = vector.shape_cast %52 : vector<8x8xbf16> to vector<1x1x8x8xbf16>
    tpu.vector_store %arg11[%c0_45, %c0_46, %c0_47, %c0_48], %55 {strides = array<i32>} : memref<1x4x8x8xbf16, #tpu.memory_space<vmem>>, vector<1x1x8x8xbf16>,
    %56 = vector.extract_strided_slice %51 {offsets = [0, 8], sizes = [8, 8], strides = [1, 1]} : vector<8x32xbf16> to vector<8x8xbf16>
    %c0_49 = arith.constant 0 : index
    %c1_50 = arith.constant 1 : index
    %c0_51 = arith.constant 0 : index
    %c0_52 = arith.constant 0 : index
    %57 = vector.load %arg11[%c0_49, %c1_50, %c0_51, %c0_52] : memref<1x4x8x8xbf16, #tpu.memory_space<vmem>>, vector<1x1x8x8xbf16>
    %58 = vector.shape_cast %57 : vector<1x1x8x8xbf16> to vector<8x8xbf16>
    %59 = vector.shape_cast %56 : vector<8x8xbf16> to vector<1x1x8x8xbf16>
    tpu.vector_store %arg11[%c0_49, %c1_50, %c0_51, %c0_52], %59 {strides = array<i32>} : memref<1x4x8x8xbf16, #tpu.memory_space<vmem>>, vector<1x1x8x8xbf16>,
    %60 = vector.extract_strided_slice %51 {offsets = [0, 16], sizes = [8, 8], strides = [1, 1]} : vector<8x32xbf16> to vector<8x8xbf16>
    %c0_53 = arith.constant 0 : index
    %c2_54 = arith.constant 2 : index
    %c0_55 = arith.constant 0 : index
    %c0_56 = arith.constant 0 : index
    %61 = vector.load %arg11[%c0_53, %c2_54, %c0_55, %c0_56] : memref<1x4x8x8xbf16, #tpu.memory_space<vmem>>, vector<1x1x8x8xbf16>
    %62 = vector.shape_cast %61 : vector<1x1x8x8xbf16> to vector<8x8xbf16>
    %63 = vector.shape_cast %60 : vector<8x8xbf16> to vector<1x1x8x8xbf16>
    tpu.vector_store %arg11[%c0_53, %c2_54, %c0_55, %c0_56], %63 {strides = array<i32>} : memref<1x4x8x8xbf16, #tpu.memory_space<vmem>>, vector<1x1x8x8xbf16>,
    %64 = vector.extract_strided_slice %51 {offsets = [0, 24], sizes = [8, 8], strides = [1, 1]} : vector<8x32xbf16> to vector<8x8xbf16>
    %c0_57 = arith.constant 0 : index
    %c3_58 = arith.constant 3 : index
    %c0_59 = arith.constant 0 : index
    %c0_60 = arith.constant 0 : index
    %65 = vector.load %arg11[%c0_57, %c3_58, %c0_59, %c0_60] : memref<1x4x8x8xbf16, #tpu.memory_space<vmem>>, vector<1x1x8x8xbf16>
    %66 = vector.shape_cast %65 : vector<1x1x8x8xbf16> to vector<8x8xbf16>
    %67 = vector.shape_cast %64 : vector<8x8xbf16> to vector<1x1x8x8xbf16>
    tpu.vector_store %arg11[%c0_57, %c3_58, %c0_59, %c0_60], %67 {strides = array<i32>} : memref<1x4x8x8xbf16, #tpu.memory_space<vmem>>, vector<1x1x8x8xbf16>,
    return
  }
  func.func @transform_0(%arg0: i32, %arg1: i32) -> (i32, i32, i32) {
    %c0_i32 = arith.constant 0 : i32
    %c0_i32_0 = arith.constant 0 : i32
    return %arg0, %arg1, %c0_i32 : i32, i32, i32
  }
  func.func @transform_1(%arg0: i32, %arg1: i32) -> (i32, i32) {
    %c0_i32 = arith.constant 0 : i32
    %c0_i32_0 = arith.constant 0 : i32
    %c0_i32_1 = arith.constant 0 : i32
    return %c0_i32, %c0_i32_0 : i32, i32
  }
  func.func @transform_2(%arg0: i32, %arg1: i32) -> (i32, i32) {
    %c0_i32 = arith.constant 0 : i32
    %c0_i32_0 = arith.constant 0 : i32
    %c0_i32_1 = arith.constant 0 : i32
    return %c0_i32, %c0_i32_0 : i32, i32
  }
  func.func @transform_3(%arg0: i32, %arg1: i32) -> (i32, i32) {
    %c0_i32 = arith.constant 0 : i32
    %c0_i32_0 = arith.constant 0 : i32
    %c0_i32_1 = arith.constant 0 : i32
    return %c0_i32, %c0_i32_0 : i32, i32
  }
  func.func @transform_4(%arg0: i32, %arg1: i32) -> (i32, i32) {
    %c0_i32 = arith.constant 0 : i32
    %c0_i32_0 = arith.constant 0 : i32
    %c0_i32_1 = arith.constant 0 : i32
    return %c0_i32, %c0_i32_0 : i32, i32
  }
  func.func @transform_5(%arg0: i32, %arg1: i32) -> (i32, i32) {
    %c0_i32 = arith.constant 0 : i32
    %c0_i32_0 = arith.constant 0 : i32
    %c0_i32_1 = arith.constant 0 : i32
    return %c0_i32, %c0_i32_0 : i32, i32
  }
  func.func @transform_6(%arg0: i32, %arg1: i32) -> (i32, i32) {
    %c0_i32 = arith.constant 0 : i32
    %c0_i32_0 = arith.constant 0 : i32
    %c0_i32_1 = arith.constant 0 : i32
    return %c0_i32, %c0_i32_0 : i32, i32
  }
  func.func @transform_7(%arg0: i32, %arg1: i32) -> (i32, i32, i32, i32) {
    %c0_i32 = arith.constant 0 : i32
    %c0_i32_0 = arith.constant 0 : i32
    %c0_i32_1 = arith.constant 0 : i32
    return %arg0, %c0_i32, %arg1, %c0_i32_0 : i32, i32, i32, i32
  }
  func.func @transform_8(%arg0: i32, %arg1: i32) -> (i32, i32, i32, i32) {
    %c0_i32 = arith.constant 0 : i32
    %c0_i32_0 = arith.constant 0 : i32
    %c0_i32_1 = arith.constant 0 : i32
    return %arg0, %c0_i32, %arg1, %c0_i32_0 : i32, i32, i32, i32
  }
  func.func @transform_9(%arg0: i32, %arg1: i32) -> (i32, i32, i32, i32) {
    %c0_i32 = arith.constant 0 : i32
    %c0_i32_0 = arith.constant 0 : i32
    %c0_i32_1 = arith.constant 0 : i32
    return %arg0, %c0_i32, %arg1, %c0_i32_0 : i32, i32, i32, i32
  }
}

</mosaic_0001>

<llo_original>
// kernel: tpu_custom_call.1
$region0: #{tpu_custom_call.1}
  #allocation0 [shape = 'u32[]', space=smem, size = 0x4, offset = 0x4, fixed_abs, tag = 'smem constant byte address 0x4 - core index']
  #allocation1 [shape = 'u32[72,128]{1,0:T(1,128)}', space=vmem, size = 0x9000, scoped, tag = 'internal scratch']
  %s0 = inlined_call_operand.hbm [shape: bf16[2,8,32], index: 0, kind: input, shape index: {}]
  %s1 = inlined_call_operand.hbm [shape: bf16[32,32], index: 1, kind: input, shape index: {}]
  %s2 = inlined_call_operand.hbm [shape: bf16[32,32], index: 2, kind: input, shape index: {}]
  %s3 = inlined_call_operand.hbm [shape: bf16[32,32], index: 3, kind: input, shape index: {}]
  %s4 = inlined_call_operand.vmem [shape: f32[1,32], index: 4, kind: input, shape index: {}]
  %s5 = inlined_call_operand.vmem [shape: f32[1,32], index: 5, kind: input, shape index: {}]
  %s6 = inlined_call_operand.vmem [shape: f32[1,32], index: 6, kind: input, shape index: {}]
  %s7 = inlined_call_operand.hbm [shape: bf16[2,4,8,8], index: 7, kind: output, shape index: {0}]
  %s8 = inlined_call_operand.hbm [shape: bf16[2,4,8,8], index: 8, kind: output, shape index: {1}]
  %s9 = inlined_call_operand.hbm [shape: bf16[2,4,8,8], index: 9, kind: output, shape index: {2}]
  %10 = xla_tuple %s7, %s8, %s9
  %s11 = sld [smem:[#allocation0]]
  $region93: #{tpu_custom_call.1} parent=0
    _
  %s13 = ssub.s32 1, %s11
  %s14 = scalar_select 0, %s13, %s11
  $region1: #{tpu_custom_call.1} parent=0
    #allocation2 [shape = 'u8[4096]{0}', space=vmem, size = 0x1000, scoped, tag = 'input window, operand 0']
    #allocation3 [shape = 's32[2]{0}', space=sflag, size = 0x8, scoped, tag = 'scoped memory for tpu_custom_call.1']
    #allocation4 [shape = 's32[2]{0}', space=sflag, size = 0x8, scoped, tag = 'scoped memory for tpu_custom_call.1']
    #allocation5 [shape = 'u8[8192]{0}', space=vmem, size = 0x2000, scoped, tag = 'input window, operand 1, single buffered']
    #allocation6 [shape = 's32[1]{0}', space=sflag, size = 0x4, scoped, tag = 'scoped memory for tpu_custom_call.1']
    #allocation7 [shape = 'u8[8192]{0}', space=vmem, size = 0x2000, scoped, tag = 'input window, operand 2, single buffered']
    #allocation8 [shape = 'u8[8192]{0}', space=vmem, size = 0x2000, scoped, tag = 'input window, operand 3, single buffered']
    #allocation9 [shape = 's32[1]{0}', space=sflag, size = 0x4, scoped, tag = 'scoped memory for tpu_custom_call.1']
    #allocation10 [shape = 'u8[16384]{0}', space=vmem, size = 0x4000, scoped, tag = 'output window, operand 0']
    #allocation11 [shape = 'u8[16384]{0}', space=vmem, size = 0x4000, scoped, tag = 'output window, operand 1']
    #allocation12 [shape = 's32[2]{0}', space=sflag, size = 0x8, scoped, tag = 'scoped memory for tpu_custom_call.1']
    #allocation13 [shape = 'u8[16384]{0}', space=vmem, size = 0x4000, scoped, tag = 'output window, operand 2']
    %15 = vsyncpa [#allocation3], 0
    %s16 = scalar_lea.sflag [#allocation3], 1
    %17 = vsyncpa %s16, 0
    %18 = vsyncpa [#allocation6], 0
    %19 = vsyncpa [#allocation9], 0
    %20 = vsyncpa [#allocation4], 0
    %s21 = scalar_lea.sflag [#allocation4], 1
    %22 = vsyncpa %s21, 0
    %23 = vsyncpa [#allocation12], 0
    %s24 = scalar_lea.sflag [#allocation12], 1
    %25 = vsyncpa %s24, 0
    loop: start=0, step=1, limit=4
    $region2: #{tpu_custom_call.1} parent=1 // loop_pre_header
      _
    $region3: #{tpu_custom_call.1} parent=1 // loop_header
      %s27 = sphi 0, %s31
      %p28 = scmp.ge.s32.totalorder %s27, 4
      %s34 = sphi 0, %s46
      %s35 = sphi 0, %s42
      %s36 = sphi 0, %s34
      %s37 = sphi 0, %s35
      %s38 = sphi 0, %s36
      %s39 = sphi 0, %s37
      %s51 = sphi 0, %s53
      %s54 = sphi 0, %s51
      %s55 = sphi 0, %s54
      %s71 = sphi 0, %s55
      %s75 = sphi 0, %s75
      %s77 = sphi 0, %s75
      %s78 = sphi 0, %s77
      %s92 = sphi 0, %s78
      %s96 = sphi 0, %s96
      %s98 = sphi 0, %s96
      %s99 = sphi 0, %s98
      %s113 = sphi 0, %s99
      %s117 = sphi 0, %s117
      %s119 = sphi 0, %s117
      %s120 = sphi 0, %s119
      %s134 = sphi 0, %s120
      %s138 = sphi 0, %s138
      %s140 = sphi 0, %s138
      %s141 = sphi 0, %s140
      %s155 = sphi 0, %s141
      %s159 = sphi 0, %s159
      %s161 = sphi 0, %s159
      %s162 = sphi 0, %s161
      %s176 = sphi 0, %s162
      %s180 = sphi 0, %s180
      %s182 = sphi 0, %s180
      %s183 = sphi 0, %s182
      %s197 = sphi 0, %s183
      %s205 = sphi 0, %s207
      %s208 = sphi 0, %s205
      %s209 = sphi 0, %s208
      %s225 = sphi 0, %s209
      %s233 = sphi 0, %s235
      %s236 = sphi 0, %s233
      %s237 = sphi 0, %s236
      %s253 = sphi 0, %s237
      %s261 = sphi 0, %s263
      %s264 = sphi 0, %s261
      %s265 = sphi 0, %s264
      %s281 = sphi 0, %s265
    $region4: #{tpu_custom_call.1} parent=1 // loop_header_branch
      %30 = sbr.rel (%p28) target = $region8
    $region5: #{tpu_custom_call.1} parent=1 // loop_body
      %s32 = ssub.s32 %s27, 1
      %s33 = ssub.s32 %s27, 2
      %s40 = sadd.s32 1, %s35
      %p41 = scmp.ge.s32.totalorder %s40, 1
      %s42 = scalar_select %p41, 0, %s40
      %s43 = sadd.s32 1, %s34
      %s44 = scalar_select %p41, %s43, %s34
      %p45 = scmp.ge.s32.totalorder %s44, 2
      %s46 = scalar_select %p45, 0, %s44
      %s47 = ssub.s32 %s34, %s46
      %s48 = ssub.s32 %s35, %s42
      %s49 = sor.u32 %s47, %s48
      %p50 = scmp.eq.s32.totalorder %s49, 0
      %s52 = sadd.s32 %s51, 1
      %s53 = scalar_select %p50, %s51, %s52
      %p56 = pneg %p50
      %p57 = scmp.eq.s32.totalorder %s27, 1
      %p58 = por %p56, %p57
      %p59 = scmp.ne.s32.totalorder %s51, %s54
      %p60 = scmp.eq.s32.totalorder %s27, 0
      %p61 = por %p59, %p60
      %p62 = scmp.ne.s32.totalorder %s51, %s54
      %p63 = scmp.eq.s32.totalorder %s32, 1
      %p64 = por %p62, %p63
      %p65 = scmp.ne.s32.totalorder %s54, %s55
      %p66 = scmp.eq.s32.totalorder %s32, 0
      %p67 = por %p65, %p66
      %p68 = scmp.ne.s32.totalorder %s54, %s55
      %p69 = scmp.eq.s32.totalorder %s33, 1
      %p70 = por %p68, %p69
      %p72 = scmp.ne.s32.totalorder %s55, %s71
      %p73 = scmp.eq.s32.totalorder %s33, 0
      %p74 = por %p72, %p73
      %s76 = sadd.s32 %s75, 1
      %p79 = scmp.eq.s32.totalorder %s27, 1
      %p80 = scmp.ne.s32.totalorder %s75, %s77
      %p81 = scmp.eq.s32.totalorder %s27, 0
      %p82 = por %p80, %p81
      %p83 = scmp.ne.s32.totalorder %s75, %s77
      %p84 = scmp.eq.s32.totalorder %s32, 1
      %p85 = por %p83, %p84
      %p86 = scmp.ne.s32.totalorder %s77, %s78
      %p87 = scmp.eq.s32.totalorder %s32, 0
      %p88 = por %p86, %p87
      %p89 = scmp.ne.s32.totalorder %s77, %s78
      %p90 = scmp.eq.s32.totalorder %s33, 1
      %p91 = por %p89, %p90
      %p93 = scmp.ne.s32.totalorder %s78, %s92
      %p94 = scmp.eq.s32.totalorder %s33, 0
      %p95 = por %p93, %p94
      %s97 = sadd.s32 %s96, 1
      %p100 = scmp.eq.s32.totalorder %s27, 1
      %p101 = scmp.ne.s32.totalorder %s96, %s98
      %p102 = scmp.eq.s32.totalorder %s27, 0
      %p103 = por %p101, %p102
      %p104 = scmp.ne.s32.totalorder %s96, %s98
      %p105 = scmp.eq.s32.totalorder %s32, 1
      %p106 = por %p104, %p105
      %p107 = scmp.ne.s32.totalorder %s98, %s99
      %p108 = scmp.eq.s32.totalorder %s32, 0
      %p109 = por %p107, %p108
      %p110 = scmp.ne.s32.totalorder %s98, %s99
      %p111 = scmp.eq.s32.totalorder %s33, 1
      %p112 = por %p110, %p111
      %p114 = scmp.ne.s32.totalorder %s99, %s113
      %p115 = scmp.eq.s32.totalorder %s33, 0
      %p116 = por %p114, %p115
      %s118 = sadd.s32 %s117, 1
      %p121 = scmp.eq.s32.totalorder %s27, 1
      %p122 = scmp.ne.s32.totalorder %s117, %s119
      %p123 = scmp.eq.s32.totalorder %s27, 0
      %p124 = por %p122, %p123
      %p125 = scmp.ne.s32.totalorder %s117, %s119
      %p126 = scmp.eq.s32.totalorder %s32, 1
      %p127 = por %p125, %p126
      %p128 = scmp.ne.s32.totalorder %s119, %s120
      %p129 = scmp.eq.s32.totalorder %s32, 0
      %p130 = por %p128, %p129
      %p131 = scmp.ne.s32.totalorder %s119, %s120
      %p132 = scmp.eq.s32.totalorder %s33, 1
      %p133 = por %p131, %p132
      %p135 = scmp.ne.s32.totalorder %s120, %s134
      %p136 = scmp.eq.s32.totalorder %s33, 0
      %p137 = por %p135, %p136
      %s139 = sadd.s32 %s138, 1
      %p142 = scmp.eq.s32.totalorder %s27, 1
      %p143 = scmp.ne.s32.totalorder %s138, %s140
      %p144 = scmp.eq.s32.totalorder %s27, 0
      %p145 = por %p143, %p144
      %p146 = scmp.ne.s32.totalorder %s138, %s140
      %p147 = scmp.eq.s32.totalorder %s32, 1
      %p148 = por %p146, %p147
      %p149 = scmp.ne.s32.totalorder %s140, %s141
      %p150 = scmp.eq.s32.totalorder %s32, 0
      %p151 = por %p149, %p150
      %p152 = scmp.ne.s32.totalorder %s140, %s141
      %p153 = scmp.eq.s32.totalorder %s33, 1
      %p154 = por %p152, %p153
      %p156 = scmp.ne.s32.totalorder %s141, %s155
      %p157 = scmp.eq.s32.totalorder %s33, 0
      %p158 = por %p156, %p157
      %s160 = sadd.s32 %s159, 1
      %p163 = scmp.eq.s32.totalorder %s27, 1
      %p164 = scmp.ne.s32.totalorder %s159, %s161
      %p165 = scmp.eq.s32.totalorder %s27, 0
      %p166 = por %p164, %p165
      %p167 = scmp.ne.s32.totalorder %s159, %s161
      %p168 = scmp.eq.s32.totalorder %s32, 1
      %p169 = por %p167, %p168
      %p170 = scmp.ne.s32.totalorder %s161, %s162
      %p171 = scmp.eq.s32.totalorder %s32, 0
      %p172 = por %p170, %p171
      %p173 = scmp.ne.s32.totalorder %s161, %s162
      %p174 = scmp.eq.s32.totalorder %s33, 1
      %p175 = por %p173, %p174
      %p177 = scmp.ne.s32.totalorder %s162, %s176
      %p178 = scmp.eq.s32.totalorder %s33, 0
      %p179 = por %p177, %p178
      %s181 = sadd.s32 %s180, 1
      %p184 = scmp.eq.s32.totalorder %s27, 1
      %p185 = scmp.ne.s32.totalorder %s180, %s182
      %p186 = scmp.eq.s32.totalorder %s27, 0
      %p187 = por %p185, %p186
      %p188 = scmp.ne.s32.totalorder %s180, %s182
      %p189 = scmp.eq.s32.totalorder %s32, 1
      %p190 = por %p188, %p189
      %p191 = scmp.ne.s32.totalorder %s182, %s183
      %p192 = scmp.eq.s32.totalorder %s32, 0
      %p193 = por %p191, %p192
      %p194 = scmp.ne.s32.totalorder %s182, %s183
      %p195 = scmp.eq.s32.totalorder %s33, 1
      %p196 = por %p194, %p195
      %p198 = scmp.ne.s32.totalorder %s183, %s197
      %p199 = scmp.eq.s32.totalorder %s33, 0
      %p200 = por %p198, %p199
      %s201 = ssub.s32 %s34, %s46
      %s202 = ssub.s32 %s35, %s42
      %s203 = sor.u32 %s201, %s202
      %p204 = scmp.eq.s32.totalorder %s203, 0
      %s206 = sadd.s32 %s205, 1
      %s207 = scalar_select %p204, %s205, %s206
      %p210 = pneg %p204
      %p211 = scmp.eq.s32.totalorder %s27, 1
      %p212 = por %p210, %p211
      %p213 = scmp.ne.s32.totalorder %s205, %s208
      %p214 = scmp.eq.s32.totalorder %s27, 0
      %p215 = por %p213, %p214
      %p216 = scmp.ne.s32.totalorder %s205, %s208
      %p217 = scmp.eq.s32.totalorder %s32, 1
      %p218 = por %p216, %p217
      %p219 = scmp.ne.s32.totalorder %s208, %s209
      %p220 = scmp.eq.s32.totalorder %s32, 0
      %p221 = por %p219, %p220
      %p222 = scmp.ne.s32.totalorder %s208, %s209
      %p223 = scmp.eq.s32.totalorder %s33, 1
      %p224 = por %p222, %p223
      %p226 = scmp.ne.s32.totalorder %s209, %s225
      %p227 = scmp.eq.s32.totalorder %s33, 0
      %p228 = por %p226, %p227
      %s229 = ssub.s32 %s34, %s46
      %s230 = ssub.s32 %s35, %s42
      %s231 = sor.u32 %s229, %s230
      %p232 = scmp.eq.s32.totalorder %s231, 0
      %s234 = sadd.s32 %s233, 1
      %s235 = scalar_select %p232, %s233, %s234
      %p238 = pneg %p232
      %p239 = scmp.eq.s32.totalorder %s27, 1
      %p240 = por %p238, %p239
      %p241 = scmp.ne.s32.totalorder %s233, %s236
      %p242 = scmp.eq.s32.totalorder %s27, 0
      %p243 = por %p241, %p242
      %p244 = scmp.ne.s32.totalorder %s233, %s236
      %p245 = scmp.eq.s32.totalorder %s32, 1
      %p246 = por %p244, %p245
      %p247 = scmp.ne.s32.totalorder %s236, %s237
      %p248 = scmp.eq.s32.totalorder %s32, 0
      %p249 = por %p247, %p248
      %p250 = scmp.ne.s32.totalorder %s236, %s237
      %p251 = scmp.eq.s32.totalorder %s33, 1
      %p252 = por %p250, %p251
      %p254 = scmp.ne.s32.totalorder %s237, %s253
      %p255 = scmp.eq.s32.totalorder %s33, 0
      %p256 = por %p254, %p255
      %s257 = ssub.s32 %s34, %s46
      %s258 = ssub.s32 %s35, %s42
      %s259 = sor.u32 %s257, %s258
      %p260 = scmp.eq.s32.totalorder %s259, 0
      %s262 = sadd.s32 %s261, 1
      %s263 = scalar_select %p260, %s261, %s262
      %p266 = pneg %p260
      %p267 = scmp.eq.s32.totalorder %s27, 1
      %p268 = por %p266, %p267
      %p269 = scmp.ne.s32.totalorder %s261, %s264
      %p270 = scmp.eq.s32.totalorder %s27, 0
      %p271 = por %p269, %p270
      %p272 = scmp.ne.s32.totalorder %s261, %s264
      %p273 = scmp.eq.s32.totalorder %s32, 1
      %p274 = por %p272, %p273
      %p275 = scmp.ne.s32.totalorder %s264, %s265
      %p276 = scmp.eq.s32.totalorder %s32, 0
      %p277 = por %p275, %p276
      %p278 = scmp.ne.s32.totalorder %s264, %s265
      %p279 = scmp.eq.s32.totalorder %s33, 1
      %p280 = por %p278, %p279
      %p282 = scmp.ne.s32.totalorder %s265, %s281
      %p283 = scmp.eq.s32.totalorder %s33, 0
      %p284 = por %p282, %p283
      %p285 = scmp.le.s32.totalorder 1, %s27
      %p286 = scmp.lt.s32.totalorder %s27, 3
      %p287 = pnand %p285, %p286
      %p288 = pneg %p287
      // Predicated region
      $region9: #{tpu_custom_call.1} parent=5 // pred_check
        _
      $region10: #{tpu_custom_call.1} parent=5 // pred_check_branch
        %290 = sbr.rel (%p287) target = $region12
      $region11: #{tpu_custom_call.1} parent=5 // pred_region
        %s291 = ssub.s32 %s27, 1
        // Predicated region
        $region13: #{tpu_custom_call.1} parent=11 // pred_check
          %p292 = pneg %p88
        $region14: #{tpu_custom_call.1} parent=11 // pred_check_branch
          %294 = sbr.rel (%p292) target = $region16
        $region15: #{tpu_custom_call.1} parent=11 // pred_region
          %296 = vsyncadd [#allocation6], 0
          %s297 = sshll.u32 %s1, 4
          %s298 = int_to_ptr.hbm [resolvable:$true] %s297
          %s299 = sshll.u32 [#allocation5], 4
          %s300 = int_to_ptr.vmem [resolvable:$true] %s299
          %305 = dma.hbm_to_vmem [thread:$0]  %s298, 256, %s300, [#allocation6], 64, 64, 4
        $region16: #{tpu_custom_call.1} parent=11 // pred_fallthru
          _
        // Predicated region
        $region17: #{tpu_custom_call.1} parent=11 // pred_check
          %p306 = pneg %p109
        $region18: #{tpu_custom_call.1} parent=11 // pred_check_branch
          %308 = sbr.rel (%p306) target = $region20
        $region19: #{tpu_custom_call.1} parent=11 // pred_region
          %310 = vsyncadd [#allocation6], 0
          %s311 = sshll.u32 %s2, 4
          %s312 = int_to_ptr.hbm [resolvable:$true] %s311
          %s313 = sshll.u32 [#allocation7], 4
          %s314 = int_to_ptr.vmem [resolvable:$true] %s313
          %319 = dma.hbm_to_vmem [thread:$0]  %s312, 256, %s314, [#allocation6], 64, 64, 4
        $region20: #{tpu_custom_call.1} parent=11 // pred_fallthru
          _
        // Predicated region
        $region21: #{tpu_custom_call.1} parent=11 // pred_check
          %p320 = pneg %p130
        $region22: #{tpu_custom_call.1} parent=11 // pred_check_branch
          %322 = sbr.rel (%p320) target = $region24
        $region23: #{tpu_custom_call.1} parent=11 // pred_region
          %324 = vsyncadd [#allocation9], 0
          %s325 = sshll.u32 %s3, 4
          %s326 = int_to_ptr.hbm [resolvable:$true] %s325
          %s327 = sshll.u32 [#allocation8], 4
          %s328 = int_to_ptr.vmem [resolvable:$true] %s327
          %333 = dma.hbm_to_vmem [thread:$0]  %s326, 256, %s328, [#allocation9], 64, 64, 4
        $region24: #{tpu_custom_call.1} parent=11 // pred_fallthru
          _
        // Predicated region
        $region25: #{tpu_custom_call.1} parent=11 // pred_check
          %p334 = pneg %p151
        $region26: #{tpu_custom_call.1} parent=11 // pred_check_branch
          %336 = sbr.rel (%p334) target = $region28
        $region27: #{tpu_custom_call.1} parent=11 // pred_region
          _
        $region28: #{tpu_custom_call.1} parent=11 // pred_fallthru
          _
        // Predicated region
        $region29: #{tpu_custom_call.1} parent=11 // pred_check
          %p337 = pneg %p172
        $region30: #{tpu_custom_call.1} parent=11 // pred_check_branch
          %339 = sbr.rel (%p337) target = $region32
        $region31: #{tpu_custom_call.1} parent=11 // pred_region
          _
        $region32: #{tpu_custom_call.1} parent=11 // pred_fallthru
          _
        // Predicated region
        $region33: #{tpu_custom_call.1} parent=11 // pred_check
          %p340 = pneg %p193
        $region34: #{tpu_custom_call.1} parent=11 // pred_check_branch
          %342 = sbr.rel (%p340) target = $region36
        $region35: #{tpu_custom_call.1} parent=11 // pred_region
          _
        $region36: #{tpu_custom_call.1} parent=11 // pred_fallthru
          _
      $region12: #{tpu_custom_call.1} parent=5 // pred_fallthru
        _
      %p343 = scmp.lt.s32.totalorder %s27, 2
      // Predicated region
      $region37: #{tpu_custom_call.1} parent=5 // pred_check
        %p344 = pneg %p343
      $region38: #{tpu_custom_call.1} parent=5 // pred_check_branch
        %346 = sbr.rel (%p344) target = $region40
      $region39: #{tpu_custom_call.1} parent=5 // pred_region
        // Predicated region
        $region41: #{tpu_custom_call.1} parent=39 // pred_check
          %p347 = pneg %p61
        $region42: #{tpu_custom_call.1} parent=39 // pred_check_branch
          %349 = sbr.rel (%p347) target = $region44
        $region43: #{tpu_custom_call.1} parent=39 // pred_region
          %s350 = sand.u32 %s51, 1
          %s351 = scalar_lea.sflag [#allocation3], %s350
          %s352 = sand.u32 %s51, 1
          %s353 = smul.addr %s352, 4
          %s354 = scalar_lea.vmem [#allocation2], %s353
          %356 = vsyncadd %s351, 0
          %s357 = sadd.s32 %s35, %s34
          %s358 = smul.addr %s357, 4
          %s359 = scalar_lea.hbm %s0, %s358
          %s361 = sshll.u32 %s359, 4
          %s362 = int_to_ptr.hbm [resolvable:$true] %s361
          %s363 = sshll.u32 %s354, 4
          %s364 = int_to_ptr.vmem [resolvable:$true] %s363
          %366 = dma.hbm_to_vmem [thread:$0]  %s362, 64, %s364, %s351
        $region44: #{tpu_custom_call.1} parent=39 // pred_fallthru
          _
      $region40: #{tpu_custom_call.1} parent=5 // pred_fallthru
        _
      %p367 = scmp.le.s32.totalorder 1, %s27
      %p368 = scmp.lt.s32.totalorder %s27, 3
      %p369 = pnand %p367, %p368
      %p370 = pneg %p369
      // Predicated region
      $region45: #{tpu_custom_call.1} parent=5 // pred_check
        _
      $region46: #{tpu_custom_call.1} parent=5 // pred_check_branch
        %372 = sbr.rel (%p369) target = $region48
      $region47: #{tpu_custom_call.1} parent=5 // pred_region
        %s373 = ssub.s32 %s27, 1
        %s374 = sand.u32 %s54, 1
        %s375 = scalar_lea.sflag [#allocation3], %s374
        %s376 = sand.u32 %s54, 1
        %s377 = smul.addr %s376, 4
        %s378 = scalar_lea.vmem [#allocation2], %s377
        // Predicated region
        $region49: #{tpu_custom_call.1} parent=47 // pred_check
          %p379 = pneg %p67
        $region50: #{tpu_custom_call.1} parent=47 // pred_check_branch
          %381 = sbr.rel (%p379) target = $region52
        $region51: #{tpu_custom_call.1} parent=47 // pred_region
          %383 = dma.done %s375, 64
        $region52: #{tpu_custom_call.1} parent=47 // pred_fallthru
          _
        // Predicated region
        $region53: #{tpu_custom_call.1} parent=47 // pred_check
          %p384 = pneg %p88
        $region54: #{tpu_custom_call.1} parent=47 // pred_check_branch
          %386 = sbr.rel (%p384) target = $region56
        $region55: #{tpu_custom_call.1} parent=47 // pred_region
          %388 = dma.done [#allocation6], 256
        $region56: #{tpu_custom_call.1} parent=47 // pred_fallthru
          _
        // Predicated region
        $region57: #{tpu_custom_call.1} parent=47 // pred_check
          %p389 = pneg %p109
        $region58: #{tpu_custom_call.1} parent=47 // pred_check_branch
          %391 = sbr.rel (%p389) target = $region60
        $region59: #{tpu_custom_call.1} parent=47 // pred_region
          %393 = dma.done [#allocation6], 256
        $region60: #{tpu_custom_call.1} parent=47 // pred_fallthru
          _
        // Predicated region
        $region61: #{tpu_custom_call.1} parent=47 // pred_check
          %p394 = pneg %p130
        $region62: #{tpu_custom_call.1} parent=47 // pred_check_branch
          %396 = sbr.rel (%p394) target = $region64
        $region63: #{tpu_custom_call.1} parent=47 // pred_region
          %398 = dma.done [#allocation9], 256
        $region64: #{tpu_custom_call.1} parent=47 // pred_fallthru
          _
        %s399 = sand.u32 %s54, 1
        %s400 = scalar_lea.sflag [#allocation3], %s399
        %s401 = sand.u32 %s54, 1
        %s402 = smul.addr %s401, 4
        %s403 = scalar_lea.vmem [#allocation2], %s402
        %p404 = pneg %p67
        %p405 = pneg %p64
        %p406 = pneg %p88
        %p407 = pneg %p85
        %p408 = pneg %p109
        %p409 = pneg %p106
        %p410 = pneg %p130
        %p411 = pneg %p127
        %p412 = pneg %p151
        %p413 = pneg %p148
        %p414 = pneg %p172
        %p415 = pneg %p169
        %p416 = pneg %p193
        %p417 = pneg %p190
        %p418 = pneg %p221
        %p419 = pneg %p218
        %s420 = sand.u32 %s208, 1
        %s421 = scalar_lea.sflag [#allocation4], %s420
        %s422 = sand.u32 %s208, 1
        %s423 = smul.addr %s422, 16
        %s424 = scalar_lea.vmem [#allocation10], %s423
        %p425 = pneg %p249
        %p426 = pneg %p246
        %s427 = sand.u32 %s32, 1
        %s428 = scalar_lea.sflag [#allocation12], %s427
        %s429 = sand.u32 %s236, 1
        %s430 = smul.addr %s429, 16
        %s431 = scalar_lea.vmem [#allocation11], %s430
        %p432 = pneg %p277
        %p433 = pneg %p274
        %s434 = sand.u32 %s32, 1
        %s435 = scalar_lea.sflag [#allocation12], %s434
        %s436 = sand.u32 %s264, 1
        %s437 = smul.addr %s436, 16
        %s438 = scalar_lea.vmem [#allocation13], %s437
        %v440 = vld [vmem:[%s378] sm:$0xf]
        %v441 = vld [vmem:[#allocation5] sm:$0xf]
        %v442 = vld [vmem:[#allocation5 + $0x4] sm:$0xf]
        %v443 = vld [vmem:[#allocation5 + $0x8] sm:$0xf]
        %v444 = vld [vmem:[#allocation5 + $0xc] sm:$0xf]
        %v445 = vld [vmem:[%s4] sm:$0x1]
        %v447 = vperm.slane %v445, 0
        %v453 = vunpack.c.l.b16 %v441
        %v454 = vunpack.c.l.b16 %v442
        %v455 = vunpack.c.l.b16 %v443
        %v456 = vunpack.c.l.b16 %v444
        %v457 = vpack.c.b16 %v454, %v453
        %v458 = vpack.c.b16 %v456, %v455
        %vm461 = vcmask 261120
        %v463 = vsel %vm461, %v440, 0
        %465 = vmatpush.bf16.msra.mxu0 0
        %466 = vmatpush.bf16.msra.mxu0 0
        %467 = vmatpush.bf16.msra.mxu0 0
        %468 = vmatpush.bf16.msra.mxu0 0
        %469 = vmatpush.bf16.msra.mxu0 0
        %470 = vmatpush.bf16.msra.mxu0 0
        %471 = vmatpush.bf16.msra.mxu0 %v458
        %472 = vmatpush.bf16.msra.mxu0 %v457
        %473 = vmatmul.bf16.gmra.mxu0 %v463
        %v474 = vpop.f32.mrf.mxu0
        %v475 = vadd.f32 %v447, %v474
        %v476 = vpop.f32.mrf.mxu0
        %477 = vdwg.mxu0
        %v478 = vpack.c.bf16 %v475, %v475
        %vm479 = vcmask 60416
        %480 = vst.msk [vmem:[%s424] sm:$0xf] %vm479, %v478
        %482 = vrot.lane.b32.xlu0 %v478, 120
        %v483 = vpop.permute.xlu0 %482
        %s485 = scalar_lea.vmem %s424, 4 [#allocation10]
        %486 = vst.msk [vmem:[%s485] sm:$0xf] %vm479, %v483
        %487 = vrot.lane.b32.xlu0 %v478, 112
        %v488 = vpop.permute.xlu0 %487
        %s490 = scalar_lea.vmem %s424, 8 [#allocation10]
        %491 = vst.msk [vmem:[%s490] sm:$0xf] %vm479, %v488
        %492 = vrot.lane.b32.xlu0 %v478, 104
        %v493 = vpop.permute.xlu0 %492
        %s495 = scalar_lea.vmem %s424, 12 [#allocation10]
        %496 = vst.msk [vmem:[%s495] sm:$0xf] %vm479, %v493
        %v497 = vld [vmem:[#allocation7] sm:$0xf]
        %v498 = vld [vmem:[#allocation7 + $0x4] sm:$0xf]
        %v499 = vld [vmem:[#allocation7 + $0x8] sm:$0xf]
        %v500 = vld [vmem:[#allocation7 + $0xc] sm:$0xf]
        %v501 = vld [vmem:[%s5] sm:$0x1]
        %v503 = vperm.slane %v501, 0
        %v509 = vunpack.c.l.b16 %v497
        %v510 = vunpack.c.l.b16 %v498
        %v511 = vunpack.c.l.b16 %v499
        %v512 = vunpack.c.l.b16 %v500
        %v513 = vpack.c.b16 %v510, %v509
        %v514 = vpack.c.b16 %v512, %v511
        %517 = vmatpush.bf16.msra.mxu0 0
        %518 = vmatpush.bf16.msra.mxu0 0
        %519 = vmatpush.bf16.msra.mxu0 0
        %520 = vmatpush.bf16.msra.mxu0 0
        %521 = vmatpush.bf16.msra.mxu0 0
        %522 = vmatpush.bf16.msra.mxu0 0
        %523 = vmatpush.bf16.msra.mxu0 %v514
        %524 = vmatpush.bf16.msra.mxu0 %v513
        %525 = vmatmul.bf16.gmra.mxu0 %v463
        %v526 = vpop.f32.mrf.mxu0
        %v527 = vadd.f32 %v503, %v526
        %v528 = vpop.f32.mrf.mxu0
        %529 = vdwg.mxu0
        %v530 = vpack.c.bf16 %v527, %v527
        %531 = vst.msk [vmem:[%s431] sm:$0xf] %vm479, %v530
        %533 = vrot.lane.b32.xlu0 %v530, 120
        %v534 = vpop.permute.xlu0 %533
        %s536 = scalar_lea.vmem %s431, 4 [#allocation11]
        %537 = vst.msk [vmem:[%s536] sm:$0xf] %vm479, %v534
        %538 = vrot.lane.b32.xlu0 %v530, 112
        %v539 = vpop.permute.xlu0 %538
        %s541 = scalar_lea.vmem %s431, 8 [#allocation11]
        %542 = vst.msk [vmem:[%s541] sm:$0xf] %vm479, %v539
        %543 = vrot.lane.b32.xlu0 %v530, 104
        %v544 = vpop.permute.xlu0 %543
        %s546 = scalar_lea.vmem %s431, 12 [#allocation11]
        %547 = vst.msk [vmem:[%s546] sm:$0xf] %vm479, %v544
        %v548 = vld [vmem:[#allocation8] sm:$0xf]
        %v549 = vld [vmem:[#allocation8 + $0x4] sm:$0xf]
        %v550 = vld [vmem:[#allocation8 + $0x8] sm:$0xf]
        %v551 = vld [vmem:[#allocation8 + $0xc] sm:$0xf]
        %v552 = vld [vmem:[%s6] sm:$0x1]
        %v554 = vperm.slane %v552, 0
        %v560 = vunpack.c.l.b16 %v548
        %v561 = vunpack.c.l.b16 %v549
        %v562 = vunpack.c.l.b16 %v550
        %v563 = vunpack.c.l.b16 %v551
        %v564 = vpack.c.b16 %v561, %v560
        %v565 = vpack.c.b16 %v563, %v562
        %568 = vmatpush.bf16.msra.mxu0 0
        %569 = vmatpush.bf16.msra.mxu0 0
        %570 = vmatpush.bf16.msra.mxu0 0
        %571 = vmatpush.bf16.msra.mxu0 0
        %572 = vmatpush.bf16.msra.mxu0 0
        %573 = vmatpush.bf16.msra.mxu0 0
        %574 = vmatpush.bf16.msra.mxu0 %v565
        %575 = vmatpush.bf16.msra.mxu0 %v564
        %576 = vmatmul.bf16.gmra.mxu0 %v463
        %v577 = vpop.f32.mrf.mxu0
        %v578 = vadd.f32 %v554, %v577
        %v579 = vpop.f32.mrf.mxu0
        %580 = vdwg.mxu0
        %v581 = vpack.c.bf16 %v578, %v578
        %582 = vst.msk [vmem:[%s438] sm:$0xf] %vm479, %v581
        %584 = vrot.lane.b32.xlu0 %v581, 120
        %v585 = vpop.permute.xlu0 %584
        %s587 = scalar_lea.vmem %s438, 4 [#allocation13]
        %588 = vst.msk [vmem:[%s587] sm:$0xf] %vm479, %v585
        %589 = vrot.lane.b32.xlu0 %v581, 112
        %v590 = vpop.permute.xlu0 %589
        %s592 = scalar_lea.vmem %s438, 8 [#allocation13]
        %593 = vst.msk [vmem:[%s592] sm:$0xf] %vm479, %v590
        %594 = vrot.lane.b32.xlu0 %v581, 104
        %v595 = vpop.permute.xlu0 %594
        %s597 = scalar_lea.vmem %s438, 12 [#allocation13]
        %598 = vst.msk [vmem:[%s597] sm:$0xf] %vm479, %v595
        %s599 = sand.u32 %s208, 1
        %s600 = scalar_lea.sflag [#allocation4], %s599
        %s601 = sand.u32 %s208, 1
        %s602 = smul.addr %s601, 16
        %s603 = scalar_lea.vmem [#allocation10], %s602
        %s604 = sand.u32 %s32, 1
        %s605 = scalar_lea.sflag [#allocation12], %s604
        %s606 = sand.u32 %s236, 1
        %s607 = smul.addr %s606, 16
        %s608 = scalar_lea.vmem [#allocation11], %s607
        %s609 = sand.u32 %s32, 1
        %s610 = scalar_lea.sflag [#allocation12], %s609
        %s611 = sand.u32 %s264, 1
        %s612 = smul.addr %s611, 16
        %s613 = scalar_lea.vmem [#allocation13], %s612
        // Predicated region
        $region65: #{tpu_custom_call.1} parent=47 // pred_check
          %p614 = pneg %p218
        $region66: #{tpu_custom_call.1} parent=47 // pred_check_branch
          %616 = sbr.rel (%p614) target = $region68
        $region67: #{tpu_custom_call.1} parent=47 // pred_region
          %618 = vsyncadd %s600, 0
          %s619 = smul.addr %s36, 4
          %s620 = sadd.s32 %s37, %s619
          %s621 = smul.addr %s620, 4
          %s622 = scalar_lea.hbm %s7, %s621
          %s623 = sshll.u32 %s603, 4
          %s624 = int_to_ptr.vmem [resolvable:$true] %s623
          %s625 = sshll.u32 %s622, 4
          %s626 = int_to_ptr.hbm [resolvable:$true] %s625
          %631 = dma.vmem_to_hbm [thread:$0]  %s624, 256, %s626, %s600, 64, 64, 4
        $region68: #{tpu_custom_call.1} parent=47 // pred_fallthru
          _
        // Predicated region
        $region69: #{tpu_custom_call.1} parent=47 // pred_check
          %p632 = pneg %p246
        $region70: #{tpu_custom_call.1} parent=47 // pred_check_branch
          %634 = sbr.rel (%p632) target = $region72
        $region71: #{tpu_custom_call.1} parent=47 // pred_region
          %636 = vsyncadd %s605, 0
          %s637 = smul.addr %s36, 4
          %s638 = sadd.s32 %s37, %s637
          %s639 = smul.addr %s638, 4
          %s640 = scalar_lea.hbm %s8, %s639
          %s641 = sshll.u32 %s608, 4
          %s642 = int_to_ptr.vmem [resolvable:$true] %s641
          %s643 = sshll.u32 %s640, 4
          %s644 = int_to_ptr.hbm [resolvable:$true] %s643
          %649 = dma.vmem_to_hbm [thread:$0]  %s642, 256, %s644, %s605, 64, 64, 4
        $region72: #{tpu_custom_call.1} parent=47 // pred_fallthru
          _
        // Predicated region
        $region73: #{tpu_custom_call.1} parent=47 // pred_check
          %p650 = pneg %p274
        $region74: #{tpu_custom_call.1} parent=47 // pred_check_branch
          %652 = sbr.rel (%p650) target = $region76
        $region75: #{tpu_custom_call.1} parent=47 // pred_region
          %654 = vsyncadd %s610, 0
          %s655 = smul.addr %s36, 4
          %s656 = sadd.s32 %s37, %s655
          %s657 = smul.addr %s656, 4
          %s658 = scalar_lea.hbm %s9, %s657
          %s659 = sshll.u32 %s613, 4
          %s660 = int_to_ptr.vmem [resolvable:$true] %s659
          %s661 = sshll.u32 %s658, 4
          %s662 = int_to_ptr.hbm [resolvable:$true] %s661
          %667 = dma.vmem_to_hbm [thread:$0]  %s660, 256, %s662, %s610, 64, 64, 4
        $region76: #{tpu_custom_call.1} parent=47 // pred_fallthru
          _
      $region48: #{tpu_custom_call.1} parent=5 // pred_fallthru
        _
      %p668 = scmp.le.s32.totalorder 2, %s27
      // Predicated region
      $region77: #{tpu_custom_call.1} parent=5 // pred_check
        %p669 = pneg %p668
      $region78: #{tpu_custom_call.1} parent=5 // pred_check_branch
        %671 = sbr.rel (%p669) target = $region80
      $region79: #{tpu_custom_call.1} parent=5 // pred_region
        %s672 = ssub.s32 %s27, 2
        // Predicated region
        $region81: #{tpu_custom_call.1} parent=79 // pred_check
          %p673 = pneg %p224
        $region82: #{tpu_custom_call.1} parent=79 // pred_check_branch
          %675 = sbr.rel (%p673) target = $region84
        $region83: #{tpu_custom_call.1} parent=79 // pred_region
          %s676 = sand.u32 %s209, 1
          %s677 = scalar_lea.sflag [#allocation4], %s676
          %s678 = sand.u32 %s209, 1
          %s679 = smul.addr %s678, 16
          %s680 = scalar_lea.vmem [#allocation10], %s679
          %682 = dma.done %s677, 256
        $region84: #{tpu_custom_call.1} parent=79 // pred_fallthru
          _
        // Predicated region
        $region85: #{tpu_custom_call.1} parent=79 // pred_check
          %p683 = pneg %p252
        $region86: #{tpu_custom_call.1} parent=79 // pred_check_branch
          %685 = sbr.rel (%p683) target = $region88
        $region87: #{tpu_custom_call.1} parent=79 // pred_region
          %s686 = sand.u32 %s33, 1
          %s687 = scalar_lea.sflag [#allocation12], %s686
          %s688 = sand.u32 %s237, 1
          %s689 = smul.addr %s688, 16
          %s690 = scalar_lea.vmem [#allocation11], %s689
          %692 = dma.done %s687, 256
        $region88: #{tpu_custom_call.1} parent=79 // pred_fallthru
          _
        // Predicated region
        $region89: #{tpu_custom_call.1} parent=79 // pred_check
          %p693 = pneg %p280
        $region90: #{tpu_custom_call.1} parent=79 // pred_check_branch
          %695 = sbr.rel (%p693) target = $region92
        $region91: #{tpu_custom_call.1} parent=79 // pred_region
          %s696 = sand.u32 %s33, 1
          %s697 = scalar_lea.sflag [#allocation12], %s696
          %s698 = sand.u32 %s265, 1
          %s699 = smul.addr %s698, 16
          %s700 = scalar_lea.vmem [#allocation13], %s699
          %702 = dma.done %s697, 256
        $region92: #{tpu_custom_call.1} parent=79 // pred_fallthru
          _
      $region80: #{tpu_custom_call.1} parent=5 // pred_fallthru
        _
    $region6: #{tpu_custom_call.1} parent=1 // loop_footer
      %s31 = sadd.s32 1, %s27
    $region7: #{tpu_custom_call.1} parent=1 // loop_footer_branch
      %26 = sbr.rel target = $region3
    $region8: #{tpu_custom_call.1} parent=1 // loop_exit
      _
    %703 = vsyncpa [#allocation3], 1
    %s704 = scalar_lea.sflag [#allocation3], 1
    %705 = vsyncpa %s704, 1
    %706 = vsyncpa [#allocation6], 1
    %707 = vsyncpa [#allocation9], 1
    %708 = vsyncpa [#allocation4], 1
    %s709 = scalar_lea.sflag [#allocation4], 1
    %710 = vsyncpa %s709, 1
    %711 = vsyncpa [#allocation12], 1
    %s712 = scalar_lea.sflag [#allocation12], 1
    %713 = vsyncpa %s712, 1

</llo_original>
